<compile_context>
chip_gen: v6e
topology: v6e:2x2x1
jax: 0.10.0
libtpu: 0.0.40
codegen_flags: <defaults>
</compile_context>

<pallas_src>
import jax
import jax.numpy as jnp
from jax.experimental import pallas as pl
from jax.experimental.pallas import tpu as pltpu

D_IN, D_H1, D_H2, D_OUT = 85, 256, 128, 83
D_IN_P, D_OUT_P = 128, 128          # lane-padded feature dims
BN_EPS = 1e-5


def _round_up(n, m):
    return ((n + m - 1) // m) * m


def _mlp_kernel(x_ref, w1_ref, t1_ref, w2_ref, t2_ref, w3_ref, b3_ref,
                o_ref, xp_ref):
    # Zero-extend x from 85 -> 128 features (lane-aligned for the MXU) and cast
    # to bf16.  Re-done every grid step so the scratch never carries stale data
    # (grid steps may be split across TensorCores).
    xp_ref[...] = jnp.zeros_like(xp_ref)
    xp_ref[:, :D_IN] = x_ref[...].astype(jnp.bfloat16)

    # layer1: Linear(85->256) with folded BN scale, + shift, + ReLU
    h1 = jnp.dot(xp_ref[...], w1_ref[...], preferred_element_type=jnp.float32)
    h1 = jnp.maximum(h1 + t1_ref[...], 0.0).astype(jnp.bfloat16)

    # layer2: Linear(256->128) with folded BN scale, + shift, + ReLU
    h2 = jnp.dot(h1, w2_ref[...], preferred_element_type=jnp.float32)
    h2 = jnp.maximum(h2 + t2_ref[...], 0.0).astype(jnp.bfloat16)

    # decoder: Linear(128->83), zero-padded to 128 output lanes (lane-dense vst)
    o_ref[...] = (jnp.dot(h2, w3_ref[...], preferred_element_type=jnp.float32)
                  + b3_ref[...])


def mlp_forward(x, params, *, bm=1024, return_padded=False):
    """x: (B, 85) float32 (or bfloat16).  Returns (B, 83) float32."""
    B = x.shape[0]

    # Batch tile: multiple of 8, never larger than the (8-rounded) batch, and
    # capped so batches > 256 get at least two grid steps (v7x: 2 TensorCores).
    bm = max(8, min(bm,
                    _round_up(B, 8),
                    max(256, _round_up(pl.cdiv(B, 2), 8))))
    grid = (pl.cdiv(B, bm),)          # ragged final tile is masked by Pallas

    whole = lambda rows, cols: pl.BlockSpec((rows, cols), lambda i: (0, 0))

    out_p = pl.pallas_call(
        _mlp_kernel,
        out_shape=jax.ShapeDtypeStruct((B, D_OUT_P), jnp.float32),
        grid=grid,
        in_specs=[
            pl.BlockSpec((bm, D_IN), lambda i: (i, 0)),  # raw x tile (no wrapper pad)
            whole(D_IN_P, D_H1),                         # bf16 W1^T * bn1_scale (rows padded to 128)
            whole(1, D_H1),                              # f32 bn1 shift (incl. linear bias)
            whole(D_H1, D_H2),                           # bf16 W2^T * bn2_scale
            whole(1, D_H2),                              # f32 bn2 shift
            whole(D_H2, D_OUT_P),                        # bf16 W3^T (cols padded to 128)
            whole(1, D_OUT_P),                           # f32 decoder bias (padded)
        ],
        out_specs=pl.BlockSpec((bm, D_OUT_P), lambda i: (i, 0)),
        scratch_shapes=[pltpu.VMEM((bm, D_IN_P), jnp.bfloat16)],
        compiler_params=pltpu.CompilerParams(
            dimension_semantics=("parallel",)),
    )(x, params["w1t"], params["t1"],
      params["w2t"], params["t2"],
      params["w3t"], params["b3"])

    if return_padded:
        return out_p                   # (B, 128); first 83 cols are the result
    return out_p[:, :D_OUT]


def init_params(key):
    """Deterministic init mirroring nn.Linear defaults (uniform +-1/sqrt(fan_in))
    and nn.BatchNorm1d defaults (gamma=1, beta=0, running_mean=0, running_var=1).
    Eval-mode BN is folded into the weights (scale) and a shift vector.  Weights
    are stored bf16 (MXU-native); shifts/bias stay f32."""
    ks = jax.random.split(key, 6)

    def linear(kw, kb, fan_in, fan_out):
        bound = 1.0 / jnp.sqrt(fan_in)
        w = jax.random.uniform(kw, (fan_out, fan_in), jnp.float32, -bound, bound)
        b = jax.random.uniform(kb, (fan_out,), jnp.float32, -bound, bound)
        return w, b

    w1, b1 = linear(ks[0], ks[1], D_IN, D_H1)
    w2, b2 = linear(ks[2], ks[3], D_H1, D_H2)
    w3, b3 = linear(ks[4], ks[5], D_H2, D_OUT)

    def fold_bn(dim, bias):
        gamma = jnp.ones((dim,), jnp.float32)
        beta = jnp.zeros((dim,), jnp.float32)
        rmean = jnp.zeros((dim,), jnp.float32)
        rvar = jnp.ones((dim,), jnp.float32)
        scale = gamma / jnp.sqrt(rvar + BN_EPS)          # per-output-feature
        shift = scale * (bias - rmean) + beta
        return scale, shift

    s1, t1 = fold_bn(D_H1, b1)
    s2, t2 = fold_bn(D_H2, b2)

    # Fold BN scale into the (transposed) weights: y = x @ (W^T * s) + t
    w1t = w1.T * s1[None, :]                             # (85, 256)
    w2t = w2.T * s2[None, :]                             # (256, 128)
    w3t = w3.T                                           # (128, 83)

    # Zero-pad to lane/sublane-aligned shapes and cast weights to bf16.
    w1t_p = (jnp.zeros((D_IN_P, D_H1), jnp.float32)
             .at[:D_IN, :].set(w1t).astype(jnp.bfloat16))
    w2t_b = w2t.astype(jnp.bfloat16)
    w3t_p = (jnp.zeros((D_H2, D_OUT_P), jnp.float32)
             .at[:, :D_OUT].set(w3t).astype(jnp.bfloat16))
    b3_p = jnp.zeros((1, D_OUT_P), jnp.float32).at[:, :D_OUT].set(b3)

    params = {
        "w1t": w1t_p, "t1": t1.reshape(1, D_H1),
        "w2t": w2t_b, "t2": t2.reshape(1, D_H2),
        "w3t": w3t_p, "b3": b3_p,
        # raw (unfolded, unpadded, f32) weights for the independent reference
        "raw": {"w1": w1, "b1": b1, "w2": w2, "b2": b2, "w3": w3, "b3": b3},
    }
    return params


def reference_forward(x, raw):
    """Pure-JAX f32 reference with explicit eval-mode BatchNorm (rm=0, rv=1, g=1, b=0)."""
    bn = lambda h: h / jnp.sqrt(1.0 + BN_EPS)
    h1 = jnp.maximum(bn(x @ raw["w1"].T + raw["b1"]), 0.0)
    h2 = jnp.maximum(bn(h1 @ raw["w2"].T + raw["b2"]), 0.0)
    return h2 @ raw["w3"].T + raw["b3"]


if __name__ == "__main__":
    key = jax.random.PRNGKey(0)
    kp, kx = jax.random.split(key)
    params = init_params(kp)

    # B=16 exercises the single-step path; B=300 exercises a multi-step grid
    # with a ragged (masked) final batch tile.
    for B in (16, 300):
        kx, sub = jax.random.split(kx)
        x = jax.random.normal(sub, (B, D_IN), jnp.float32)

        out = jax.block_until_ready(mlp_forward(x, params))
        ref = reference_forward(x, params["raw"])

        assert out.shape == (B, D_OUT)
        err = float(jnp.max(jnp.abs(out - ref)))
        # bf16 MXU path -> looser tolerance than the pure-f32 kernel.
        assert jnp.allclose(out, ref, atol=3e-2, rtol=3e-2), \
            f"mismatch vs reference at B={B}: max abs err {err}"

    print("KERNEL_OK")
</pallas_src>

<mosaic_0001>
module attributes {stable_mosaic.version = 11 : i64} {
  func.func @_mlp_kernel(%arg0: i32, %arg1: memref<16x85xf32, #tpu.memory_space<vmem>>, %arg2: memref<128x256xbf16, #tpu.memory_space<vmem>>, %arg3: memref<1x256xf32, #tpu.memory_space<vmem>>, %arg4: memref<256x128xbf16, #tpu.memory_space<vmem>>, %arg5: memref<1x128xf32, #tpu.memory_space<vmem>>, %arg6: memref<128x128xbf16, #tpu.memory_space<vmem>>, %arg7: memref<1x128xf32, #tpu.memory_space<vmem>>, %arg8: memref<16x128xf32, #tpu.memory_space<vmem>>, %arg9: memref<16x128xbf16, #tpu.memory_space<vmem>>) attributes {dimension_semantics = [#tpu.dimension_semantics<parallel>], iteration_bounds = array<i64: 1>, scalar_prefetch = 0 : i64, scratch_operands = 1 : i64, tpu.core_type = #tpu.core_type<tc>, window_params = [{transform_indices = @transform_0, window_bounds = array<i64: 16, 85>}, {pipeline_mode = #tpu.pipeline_mode<synchronous>, transform_indices = @transform_1, window_bounds = array<i64: 128, 256>}, {pipeline_mode = #tpu.pipeline_mode<synchronous>, transform_indices = @transform_2, window_bounds = array<i64: 1, 256>}, {pipeline_mode = #tpu.pipeline_mode<synchronous>, transform_indices = @transform_3, window_bounds = array<i64: 256, 128>}, {pipeline_mode = #tpu.pipeline_mode<synchronous>, transform_indices = @transform_4, window_bounds = array<i64: 1, 128>}, {pipeline_mode = #tpu.pipeline_mode<synchronous>, transform_indices = @transform_5, window_bounds = array<i64: 128, 128>}, {pipeline_mode = #tpu.pipeline_mode<synchronous>, transform_indices = @transform_6, window_bounds = array<i64: 1, 128>}, {transform_indices = @transform_7, window_bounds = array<i64: 16, 128>}]} {
    %cst = arith.constant 0.000000e+00 : bf16
    %0 = vector.broadcast %cst : bf16 to vector<16x128xbf16>
    %c0 = arith.constant 0 : index
    %c0_0 = arith.constant 0 : index
    %1 = vector.load %arg9[%c0, %c0_0] : memref<16x128xbf16, #tpu.memory_space<vmem>>, vector<16x128xbf16>
    tpu.vector_store %arg9[%c0, %c0_0], %0 {strides = array<i32>} : memref<16x128xbf16, #tpu.memory_space<vmem>>, vector<16x128xbf16>,
    %c0_1 = arith.constant 0 : index
    %c0_2 = arith.constant 0 : index
    %2 = vector.load %arg1[%c0_1, %c0_2] : memref<16x85xf32, #tpu.memory_space<vmem>>, vector<16x85xf32>
    %3 = arith.truncf %2 : vector<16x85xf32> to vector<16x85xbf16>
    %c0_3 = arith.constant 0 : index
    %c0_4 = arith.constant 0 : index
    %4 = vector.load %arg9[%c0_3, %c0_4] : memref<16x128xbf16, #tpu.memory_space<vmem>>, vector<16x85xbf16>
    tpu.vector_store %arg9[%c0_3, %c0_4], %3 {strides = array<i32>} : memref<16x128xbf16, #tpu.memory_space<vmem>>, vector<16x85xbf16>,
    %c0_5 = arith.constant 0 : index
    %c0_6 = arith.constant 0 : index
    %5 = vector.load %arg9[%c0_5, %c0_6] : memref<16x128xbf16, #tpu.memory_space<vmem>>, vector<16x128xbf16>
    %c0_7 = arith.constant 0 : index
    %c0_8 = arith.constant 0 : index
    %6 = vector.load %arg2[%c0_7, %c0_8] : memref<128x256xbf16, #tpu.memory_space<vmem>>, vector<128x256xbf16>
    %cst_9 = arith.constant dense<0.000000e+00> : vector<16x256xf32>
    %7 = tpu.matmul %5, %6, %cst_9 {dimension_numbers = #tpu.dot_dimension_numbers<[1], [0], [0], [1], [0, 0, 1, 1], [], []>} : vector<16x128xbf16>, vector<128x256xbf16>, vector<16x256xf32> -> vector<16x256xf32>
    %c0_10 = arith.constant 0 : index
    %c0_11 = arith.constant 0 : index
    %8 = vector.load %arg3[%c0_10, %c0_11] : memref<1x256xf32, #tpu.memory_space<vmem>>, vector<1x256xf32>
    %9 = vector.broadcast %8 : vector<1x256xf32> to vector<16x256xf32>
    %10 = arith.addf %7, %9 : vector<16x256xf32>
    %cst_12 = arith.constant 0.000000e+00 : f32
    %11 = vector.broadcast %cst_12 : f32 to vector<16x256xf32>
    %12 = arith.maximumf %10, %11 : vector<16x256xf32>
    %13 = arith.truncf %12 : vector<16x256xf32> to vector<16x256xbf16>
    %c0_13 = arith.constant 0 : index
    %c0_14 = arith.constant 0 : index
    %14 = vector.load %arg4[%c0_13, %c0_14] : memref<256x128xbf16, #tpu.memory_space<vmem>>, vector<256x128xbf16>
    %cst_15 = arith.constant dense<0.000000e+00> : vector<16x128xf32>
    %15 = tpu.matmul %13, %14, %cst_15 {dimension_numbers = #tpu.dot_dimension_numbers<[1], [0], [0], [1], [0, 0, 1, 1], [], []>} : vector<16x256xbf16>, vector<256x128xbf16>, vector<16x128xf32> -> vector<16x128xf32>
    %c0_16 = arith.constant 0 : index
    %c0_17 = arith.constant 0 : index
    %16 = vector.load %arg5[%c0_16, %c0_17] : memref<1x128xf32, #tpu.memory_space<vmem>>, vector<1x128xf32>
    %17 = vector.broadcast %16 : vector<1x128xf32> to vector<16x128xf32>
    %18 = arith.addf %15, %17 : vector<16x128xf32>
    %cst_18 = arith.constant 0.000000e+00 : f32
    %19 = vector.broadcast %cst_18 : f32 to vector<16x128xf32>
    %20 = arith.maximumf %18, %19 : vector<16x128xf32>
    %21 = arith.truncf %20 : vector<16x128xf32> to vector<16x128xbf16>
    %c0_19 = arith.constant 0 : index
    %c0_20 = arith.constant 0 : index
    %22 = vector.load %arg6[%c0_19, %c0_20] : memref<128x128xbf16, #tpu.memory_space<vmem>>, vector<128x128xbf16>
    %cst_21 = arith.constant dense<0.000000e+00> : vector<16x128xf32>
    %23 = tpu.matmul %21, %22, %cst_21 {dimension_numbers = #tpu.dot_dimension_numbers<[1], [0], [0], [1], [0, 0, 1, 1], [], []>} : vector<16x128xbf16>, vector<128x128xbf16>, vector<16x128xf32> -> vector<16x128xf32>
    %c0_22 = arith.constant 0 : index
    %c0_23 = arith.constant 0 : index
    %24 = vector.load %arg7[%c0_22, %c0_23] : memref<1x128xf32, #tpu.memory_space<vmem>>, vector<1x128xf32>
    %25 = vector.broadcast %24 : vector<1x128xf32> to vector<16x128xf32>
    %26 = arith.addf %23, %25 : vector<16x128xf32>
    %c0_24 = arith.constant 0 : index
    %c0_25 = arith.constant 0 : index
    %27 = vector.load %arg8[%c0_24, %c0_25] : memref<16x128xf32, #tpu.memory_space<vmem>>, vector<16x128xf32>
    tpu.vector_store %arg8[%c0_24, %c0_25], %26 {strides = array<i32>} : memref<16x128xf32, #tpu.memory_space<vmem>>, vector<16x128xf32>,
    return
  }
  func.func @transform_0(%arg0: i32) -> (i32, i32) {
    %c0_i32 = arith.constant 0 : i32
    %c0_i32_0 = arith.constant 0 : i32
    return %arg0, %c0_i32 : i32, i32
  }
  func.func @transform_1(%arg0: i32) -> (i32, i32) {
    %c0_i32 = arith.constant 0 : i32
    %c0_i32_0 = arith.constant 0 : i32
    %c0_i32_1 = arith.constant 0 : i32
    return %c0_i32, %c0_i32_0 : i32, i32
  }
  func.func @transform_2(%arg0: i32) -> (i32, i32) {
    %c0_i32 = arith.constant 0 : i32
    %c0_i32_0 = arith.constant 0 : i32
    %c0_i32_1 = arith.constant 0 : i32
    return %c0_i32, %c0_i32_0 : i32, i32
  }
  func.func @transform_3(%arg0: i32) -> (i32, i32) {
    %c0_i32 = arith.constant 0 : i32
    %c0_i32_0 = arith.constant 0 : i32
    %c0_i32_1 = arith.constant 0 : i32
    return %c0_i32, %c0_i32_0 : i32, i32
  }
  func.func @transform_4(%arg0: i32) -> (i32, i32) {
    %c0_i32 = arith.constant 0 : i32
    %c0_i32_0 = arith.constant 0 : i32
    %c0_i32_1 = arith.constant 0 : i32
    return %c0_i32, %c0_i32_0 : i32, i32
  }
  func.func @transform_5(%arg0: i32) -> (i32, i32) {
    %c0_i32 = arith.constant 0 : i32
    %c0_i32_0 = arith.constant 0 : i32
    %c0_i32_1 = arith.constant 0 : i32
    return %c0_i32, %c0_i32_0 : i32, i32
  }
  func.func @transform_6(%arg0: i32) -> (i32, i32) {
    %c0_i32 = arith.constant 0 : i32
    %c0_i32_0 = arith.constant 0 : i32
    %c0_i32_1 = arith.constant 0 : i32
    return %c0_i32, %c0_i32_0 : i32, i32
  }
  func.func @transform_7(%arg0: i32) -> (i32, i32) {
    %c0_i32 = arith.constant 0 : i32
    %c0_i32_0 = arith.constant 0 : i32
    return %arg0, %c0_i32 : i32, i32
  }
}

</mosaic_0001>

<llo_original>
// kernel: tpu_custom_call.1
$region0: #{tpu_custom_call.1}
  #allocation0 [shape = 'u32[]', space=smem, size = 0x4, offset = 0x4, fixed_abs, tag = 'smem constant byte address 0x4 - core index']
  #allocation1 [shape = 'u32[144,128]{1,0:T(1,128)}', space=vmem, size = 0x12000, scoped, tag = 'internal scratch']
  #allocation2 [shape = 'bf16[16,128]{1,0:T(8,128)(2,1)}', space=vmem, size = 0x1000, scoped, tag = 'scratch operand']
  %s0 = inlined_call_operand.hbm [shape: f32[16,85], index: 0, kind: input, shape index: {}]
  %s1 = inlined_call_operand.hbm [shape: bf16[128,256], index: 1, kind: input, shape index: {}]
  %s2 = inlined_call_operand.vmem [shape: f32[1,256], index: 2, kind: input, shape index: {}]
  %s3 = inlined_call_operand.hbm [shape: bf16[256,128], index: 3, kind: input, shape index: {}]
  %s4 = inlined_call_operand.vmem [shape: f32[1,128], index: 4, kind: input, shape index: {}]
  %s5 = inlined_call_operand.hbm [shape: bf16[128,128], index: 5, kind: input, shape index: {}]
  %s6 = inlined_call_operand.vmem [shape: f32[1,128], index: 6, kind: input, shape index: {}]
  %s7 = inlined_call_operand.hbm [shape: f32[16,128], index: 7, kind: output, shape index: {}]
  %s8 = sld [smem:[#allocation0]]
  $region54: #{tpu_custom_call.1} parent=0
    _
  %s10 = ssub.s32 1, %s8
  %s11 = scalar_select 0, %s10, %s8
  $region1: #{tpu_custom_call.1} parent=0
    #allocation3 [shape = 'u8[8192]{0}', space=vmem, size = 0x2000, scoped, tag = 'input window, operand 0, single buffered']
    #allocation4 [shape = 's32[1]{0}', space=sflag, size = 0x4, scoped, tag = 'scoped memory for tpu_custom_call.1']
    #allocation5 [shape = 's32[1]{0}', space=sflag, size = 0x4, scoped, tag = 'scoped memory for tpu_custom_call.1']
    #allocation6 [shape = 'u8[65536]{0}', space=vmem, size = 0x10000, scoped, tag = 'input window, operand 1, single buffered']
    #allocation7 [shape = 's32[1]{0}', space=sflag, size = 0x4, scoped, tag = 'scoped memory for tpu_custom_call.1']
    #allocation8 [shape = 'u8[65536]{0}', space=vmem, size = 0x10000, scoped, tag = 'input window, operand 3, single buffered']
    #allocation9 [shape = 'u8[32768]{0}', space=vmem, size = 0x8000, scoped, tag = 'input window, operand 5, single buffered']
    #allocation10 [shape = 's32[1]{0}', space=sflag, size = 0x4, scoped, tag = 'scoped memory for tpu_custom_call.1']
    #allocation11 [shape = 'u8[8192]{0}', space=vmem, size = 0x2000, scoped, tag = 'output window, operand 0, single buffered']
    %12 = vsyncpa [#allocation4], 0
    %13 = vsyncpa [#allocation7], 0
    %14 = vsyncpa [#allocation10], 0
    %15 = vsyncpa [#allocation5], 0
    // Predicated region
    $region2: #{tpu_custom_call.1} parent=1 // pred_check
      _
    $region3: #{tpu_custom_call.1} parent=1 // pred_check_branch
      %17 = sbr.rel (0) target = $region5
    $region4: #{tpu_custom_call.1} parent=1 // pred_region
      %s19 = ssub.s32 256, 256
      %20 = vsyncadd [#allocation4], %s19
      %s21 = sshll.u32 [#allocation3], 4
      %s22 = int_to_ptr.vmem [resolvable:$true] %s21
      %27 = dma.hbm_to_vmem [thread:$0]  %s0, 256, %s22, [#allocation4], 128, 128, 8
    $region5: #{tpu_custom_call.1} parent=1 // pred_fallthru
      _
    // Predicated region
    $region6: #{tpu_custom_call.1} parent=1 // pred_check
      _
    $region7: #{tpu_custom_call.1} parent=1 // pred_check_branch
      %29 = sbr.rel (0) target = $region9
    $region8: #{tpu_custom_call.1} parent=1 // pred_region
      %s31 = ssub.s32 2048, 2048
      %32 = vsyncadd [#allocation7], %s31
      %s33 = sshll.u32 [#allocation6], 4
      %s34 = int_to_ptr.vmem [resolvable:$true] %s33
      %39 = dma.hbm_to_vmem [thread:$0]  %s1, 2048, %s34, [#allocation7], 128, 128, 8
    $region9: #{tpu_custom_call.1} parent=1 // pred_fallthru
      _
    // Predicated region
    $region10: #{tpu_custom_call.1} parent=1 // pred_check
      _
    $region11: #{tpu_custom_call.1} parent=1 // pred_check_branch
      %41 = sbr.rel (0) target = $region13
    $region12: #{tpu_custom_call.1} parent=1 // pred_region
      _
    $region13: #{tpu_custom_call.1} parent=1 // pred_fallthru
      _
    // Predicated region
    $region14: #{tpu_custom_call.1} parent=1 // pred_check
      _
    $region15: #{tpu_custom_call.1} parent=1 // pred_check_branch
      %43 = sbr.rel (0) target = $region17
    $region16: #{tpu_custom_call.1} parent=1 // pred_region
      %s45 = ssub.s32 2048, 2048
      %46 = vsyncadd [#allocation7], %s45
      %s47 = sshll.u32 [#allocation8], 4
      %s48 = int_to_ptr.vmem [resolvable:$true] %s47
      %53 = dma.hbm_to_vmem [thread:$0]  %s3, 2048, %s48, [#allocation7], 64, 64, 4
    $region17: #{tpu_custom_call.1} parent=1 // pred_fallthru
      _
    // Predicated region
    $region18: #{tpu_custom_call.1} parent=1 // pred_check
      _
    $region19: #{tpu_custom_call.1} parent=1 // pred_check_branch
      %55 = sbr.rel (0) target = $region21
    $region20: #{tpu_custom_call.1} parent=1 // pred_region
      _
    $region21: #{tpu_custom_call.1} parent=1 // pred_fallthru
      _
    // Predicated region
    $region22: #{tpu_custom_call.1} parent=1 // pred_check
      _
    $region23: #{tpu_custom_call.1} parent=1 // pred_check_branch
      %57 = sbr.rel (0) target = $region25
    $region24: #{tpu_custom_call.1} parent=1 // pred_region
      %s59 = ssub.s32 1024, 1024
      %60 = vsyncadd [#allocation10], %s59
      %s61 = sshll.u32 [#allocation9], 4
      %s62 = int_to_ptr.vmem [resolvable:$true] %s61
      %67 = dma.hbm_to_vmem [thread:$0]  %s5, 1024, %s62, [#allocation10], 64, 64, 4
    $region25: #{tpu_custom_call.1} parent=1 // pred_fallthru
      _
    // Predicated region
    $region26: #{tpu_custom_call.1} parent=1 // pred_check
      _
    $region27: #{tpu_custom_call.1} parent=1 // pred_check_branch
      %69 = sbr.rel (0) target = $region29
    $region28: #{tpu_custom_call.1} parent=1 // pred_region
      _
    $region29: #{tpu_custom_call.1} parent=1 // pred_fallthru
      _
    // Predicated region
    $region30: #{tpu_custom_call.1} parent=1 // pred_check
      _
    $region31: #{tpu_custom_call.1} parent=1 // pred_check_branch
      %71 = sbr.rel (0) target = $region33
    $region32: #{tpu_custom_call.1} parent=1 // pred_region
      %72 = dma.done [#allocation4], 256
    $region33: #{tpu_custom_call.1} parent=1 // pred_fallthru
      _
    // Predicated region
    $region34: #{tpu_custom_call.1} parent=1 // pred_check
      _
    $region35: #{tpu_custom_call.1} parent=1 // pred_check_branch
      %74 = sbr.rel (0) target = $region37
    $region36: #{tpu_custom_call.1} parent=1 // pred_region
      %75 = dma.done [#allocation7], 2048
    $region37: #{tpu_custom_call.1} parent=1 // pred_fallthru
      _
    // Predicated region
    $region38: #{tpu_custom_call.1} parent=1 // pred_check
      _
    $region39: #{tpu_custom_call.1} parent=1 // pred_check_branch
      %77 = sbr.rel (0) target = $region41
    $region40: #{tpu_custom_call.1} parent=1 // pred_region
      %78 = dma.done [#allocation7], 2048
    $region41: #{tpu_custom_call.1} parent=1 // pred_fallthru
      _
    // Predicated region
    $region42: #{tpu_custom_call.1} parent=1 // pred_check
      _
    $region43: #{tpu_custom_call.1} parent=1 // pred_check_branch
      %80 = sbr.rel (0) target = $region45
    $region44: #{tpu_custom_call.1} parent=1 // pred_region
      %81 = dma.done [#allocation10], 1024
    $region45: #{tpu_custom_call.1} parent=1 // pred_fallthru
      _
    %83 = vst [vmem:[#allocation2] sm:$0xf] 0
    %84 = vst [vmem:[#allocation2 + $0x4] sm:$0xf] 0
    %v85 = vld [vmem:[#allocation3] sm:$0xff]
    %v86 = vld [vmem:[#allocation3 + $0x8] sm:$0xff]
    %v87 = vpack.c.bf16 %v86, %v85
    %v89 = vunpack.c.l.b16 %v87
    %v90 = vunpack.c.h.b16 %v87
    %v91 = vpack.c.b16 %v89, %v89
    %v92 = vpack.c.b16 %v90, %v90
    %vm95 = vcmask 691200
    %96 = vst.msk [vmem:[#allocation2] sm:$0xf] %vm95, %v91
    %97 = vst.msk [vmem:[#allocation2 + $0x4] sm:$0xf] %vm95, %v92
    %v98 = vld [vmem:[#allocation2] sm:$0xf]
    %v99 = vld [vmem:[#allocation2 + $0x4] sm:$0xf]
    %v100 = vld [vmem:[#allocation6] sm:$0xff]
    %v101 = vld [vmem:[#allocation6 + $0x8] sm:$0xff]
    %v102 = vld [vmem:[#allocation6 + $0x10] sm:$0xff]
    %v103 = vld [vmem:[#allocation6 + $0x18] sm:$0xff]
    %v104 = vld [vmem:[#allocation6 + $0x20] sm:$0xff]
    %v105 = vld [vmem:[#allocation6 + $0x28] sm:$0xff]
    %v106 = vld [vmem:[#allocation6 + $0x30] sm:$0xff]
    %v107 = vld [vmem:[#allocation6 + $0x38] sm:$0xff]
    %v108 = vld [vmem:[#allocation6 + $0x40] sm:$0xff]
    %v109 = vld [vmem:[#allocation6 + $0x48] sm:$0xff]
    %v110 = vld [vmem:[#allocation6 + $0x50] sm:$0xff]
    %v111 = vld [vmem:[#allocation6 + $0x58] sm:$0xff]
    %v112 = vld [vmem:[#allocation6 + $0x60] sm:$0xff]
    %v113 = vld [vmem:[#allocation6 + $0x68] sm:$0xff]
    %v114 = vld [vmem:[#allocation6 + $0x70] sm:$0xff]
    %v115 = vld [vmem:[#allocation6 + $0x78] sm:$0xff]
    %v116 = vld [vmem:[%s2] sm:$0x3]
    %v118 = vlaneseq
    %v119 = vshrl.u32 %v118, 7
    %v120 = vsub.s32 0, %v119
    %v121 = vrot.slane %v116, %v120
    %v122 = vlaneseq
    %v123 = vshrl.u32 %v122, 7
    %v124 = vsub.s32 1, %v123
    %v125 = vrot.slane %v116, %v124
    %v130 = vunpack.c.l.b16 %v98
    %v131 = vunpack.c.l.b16 %v99
    %v132 = vpack.c.b16 %v131, %v130
    %v150 = vunpack.c.l.b16 %v100
    %v151 = vunpack.c.h.b16 %v100
    %v152 = vunpack.c.l.b16 %v101
    %v153 = vunpack.c.h.b16 %v101
    %v154 = vunpack.c.l.b16 %v102
    %v155 = vunpack.c.h.b16 %v102
    %v156 = vunpack.c.l.b16 %v103
    %v157 = vunpack.c.h.b16 %v103
    %v158 = vunpack.c.l.b16 %v104
    %v159 = vunpack.c.h.b16 %v104
    %v160 = vunpack.c.l.b16 %v105
    %v161 = vunpack.c.h.b16 %v105
    %v162 = vunpack.c.l.b16 %v106
    %v163 = vunpack.c.h.b16 %v106
    %v164 = vunpack.c.l.b16 %v107
    %v165 = vunpack.c.h.b16 %v107
    %v166 = vunpack.c.l.b16 %v108
    %v167 = vunpack.c.h.b16 %v108
    %v168 = vunpack.c.l.b16 %v109
    %v169 = vunpack.c.h.b16 %v109
    %v170 = vunpack.c.l.b16 %v110
    %v171 = vunpack.c.h.b16 %v110
    %v172 = vunpack.c.l.b16 %v111
    %v173 = vunpack.c.h.b16 %v111
    %v174 = vunpack.c.l.b16 %v112
    %v175 = vunpack.c.h.b16 %v112
    %v176 = vunpack.c.l.b16 %v113
    %v177 = vunpack.c.h.b16 %v113
    %v178 = vunpack.c.l.b16 %v114
    %v179 = vunpack.c.h.b16 %v114
    %v180 = vunpack.c.l.b16 %v115
    %v181 = vunpack.c.h.b16 %v115
    %v182 = vpack.c.b16 %v152, %v150
    %v183 = vpack.c.b16 %v153, %v151
    %v184 = vpack.c.b16 %v156, %v154
    %v185 = vpack.c.b16 %v157, %v155
    %v186 = vpack.c.b16 %v160, %v158
    %v187 = vpack.c.b16 %v161, %v159
    %v188 = vpack.c.b16 %v164, %v162
    %v189 = vpack.c.b16 %v165, %v163
    %v190 = vpack.c.b16 %v168, %v166
    %v191 = vpack.c.b16 %v169, %v167
    %v192 = vpack.c.b16 %v172, %v170
    %v193 = vpack.c.b16 %v173, %v171
    %v194 = vpack.c.b16 %v176, %v174
    %v195 = vpack.c.b16 %v177, %v175
    %v196 = vpack.c.b16 %v180, %v178
    %v197 = vpack.c.b16 %v181, %v179
    %214 = vmatprep.subr.bf16.mxu0 %v197
    %215 = vmatpush1.bf16.msra.mxu0 %v196
    %216 = vmatprep.subr.bf16.mxu0 %v195
    %217 = vmatpush1.bf16.msra.mxu0 %v194
    %218 = vmatprep.subr.bf16.mxu0 %v193
    %219 = vmatpush1.bf16.msra.mxu0 %v192
    %220 = vmatprep.subr.bf16.mxu0 %v191
    %221 = vmatpush1.bf16.msra.mxu0 %v190
    %222 = vmatprep.subr.bf16.mxu0 %v189
    %223 = vmatpush1.bf16.msra.mxu0 %v188
    %224 = vmatprep.subr.bf16.mxu0 %v187
    %225 = vmatpush1.bf16.msra.mxu0 %v186
    %226 = vmatprep.subr.bf16.mxu0 %v185
    %227 = vmatpush1.bf16.msra.mxu0 %v184
    %228 = vmatprep.subr.bf16.mxu0 %v183
    %229 = vmatpush1.bf16.msra.mxu0 %v182
    %230 = vmatprep.subr.bf16.mxu0 0
    %231 = vmatpush2.bf16.msra.mxu0 0
    %232 = vmatprep.subr.bf16.mxu0 0
    %233 = vmatpush2.bf16.msra.mxu0 0
    %234 = vmatprep.subr.bf16.mxu0 0
    %235 = vmatpush2.bf16.msra.mxu0 0
    %236 = vmatprep.subr.bf16.mxu0 0
    %237 = vmatpush2.bf16.msra.mxu0 0
    %238 = vmatprep.subr.bf16.mxu0 0
    %239 = vmatpush2.bf16.msra.mxu0 0
    %240 = vmatprep.subr.bf16.mxu0 0
    %241 = vmatpush2.bf16.msra.mxu0 0
    %242 = vmatprep.subr.bf16.mxu0 0
    %243 = vmatpush2.bf16.msra.mxu0 0
    %244 = vmatprep.subr.bf16.mxu0 0
    %245 = vmatpush2.bf16.msra.mxu0 0
    %246 = vmatprep.mubr.bf16.mxu0 0
    %247 = vmatmul.mubr.bf16.gmra.mxu0 %v132
    %v248 = vpop.f32.mrf.mxu0
    %v249 = vadd.f32 %v121, %v248
    %v250 = vpop.f32.mrf.mxu0
    %v251 = vadd.f32 %v125, %v250
    %v252 = vpop.f32.mrf.mxu0
    %v253 = vadd.f32 %v121, %v252
    %v254 = vpop.f32.mrf.mxu0
    %v255 = vadd.f32 %v125, %v254
    %256 = vdwg.mxu0
    %v257 = vmax.f32 %v249, 0.0
    %v258 = vmax.f32 %v251, 0.0
    %v259 = vmax.f32 %v253, 0.0
    %v260 = vmax.f32 %v255, 0.0
    %v261 = vpack.c.bf16 %v259, %v257
    %v262 = vpack.c.bf16 %v260, %v258
    %v263 = vld [vmem:[#allocation8] sm:$0xf]
    %v264 = vld [vmem:[#allocation8 + $0x4] sm:$0xf]
    %v265 = vld [vmem:[#allocation8 + $0x8] sm:$0xf]
    %v266 = vld [vmem:[#allocation8 + $0xc] sm:$0xf]
    %v267 = vld [vmem:[#allocation8 + $0x10] sm:$0xf]
    %v268 = vld [vmem:[#allocation8 + $0x14] sm:$0xf]
    %v269 = vld [vmem:[#allocation8 + $0x18] sm:$0xf]
    %v270 = vld [vmem:[#allocation8 + $0x1c] sm:$0xf]
    %v271 = vld [vmem:[#allocation8 + $0x20] sm:$0xf]
    %v272 = vld [vmem:[#allocation8 + $0x24] sm:$0xf]
    %v273 = vld [vmem:[#allocation8 + $0x28] sm:$0xf]
    %v274 = vld [vmem:[#allocation8 + $0x2c] sm:$0xf]
    %v275 = vld [vmem:[#allocation8 + $0x30] sm:$0xf]
    %v276 = vld [vmem:[#allocation8 + $0x34] sm:$0xf]
    %v277 = vld [vmem:[#allocation8 + $0x38] sm:$0xf]
    %v278 = vld [vmem:[#allocation8 + $0x3c] sm:$0xf]
    %v279 = vld [vmem:[#allocation8 + $0x40] sm:$0xf]
    %v280 = vld [vmem:[#allocation8 + $0x44] sm:$0xf]
    %v281 = vld [vmem:[#allocation8 + $0x48] sm:$0xf]
    %v282 = vld [vmem:[#allocation8 + $0x4c] sm:$0xf]
    %v283 = vld [vmem:[#allocation8 + $0x50] sm:$0xf]
    %v284 = vld [vmem:[#allocation8 + $0x54] sm:$0xf]
    %v285 = vld [vmem:[#allocation8 + $0x58] sm:$0xf]
    %v286 = vld [vmem:[#allocation8 + $0x5c] sm:$0xf]
    %v287 = vld [vmem:[#allocation8 + $0x60] sm:$0xf]
    %v288 = vld [vmem:[#allocation8 + $0x64] sm:$0xf]
    %v289 = vld [vmem:[#allocation8 + $0x68] sm:$0xf]
    %v290 = vld [vmem:[#allocation8 + $0x6c] sm:$0xf]
    %v291 = vld [vmem:[#allocation8 + $0x70] sm:$0xf]
    %v292 = vld [vmem:[#allocation8 + $0x74] sm:$0xf]
    %v293 = vld [vmem:[#allocation8 + $0x78] sm:$0xf]
    %v294 = vld [vmem:[#allocation8 + $0x7c] sm:$0xf]
    %v295 = vld [vmem:[%s4] sm:$0x1]
    %v297 = vlaneseq
    %v298 = vshrl.u32 %v297, 7
    %v299 = vsub.s32 0, %v298
    %v300 = vrot.slane %v295, %v299
    %v334 = vunpack.c.l.b16 %v263
    %v335 = vunpack.c.l.b16 %v264
    %v336 = vunpack.c.l.b16 %v265
    %v337 = vunpack.c.l.b16 %v266
    %v338 = vunpack.c.l.b16 %v267
    %v339 = vunpack.c.l.b16 %v268
    %v340 = vunpack.c.l.b16 %v269
    %v341 = vunpack.c.l.b16 %v270
    %v342 = vunpack.c.l.b16 %v271
    %v343 = vunpack.c.l.b16 %v272
    %v344 = vunpack.c.l.b16 %v273
    %v345 = vunpack.c.l.b16 %v274
    %v346 = vunpack.c.l.b16 %v275
    %v347 = vunpack.c.l.b16 %v276
    %v348 = vunpack.c.l.b16 %v277
    %v349 = vunpack.c.l.b16 %v278
    %v350 = vunpack.c.l.b16 %v279
    %v351 = vunpack.c.l.b16 %v280
    %v352 = vunpack.c.l.b16 %v281
    %v353 = vunpack.c.l.b16 %v282
    %v354 = vunpack.c.l.b16 %v283
    %v355 = vunpack.c.l.b16 %v284
    %v356 = vunpack.c.l.b16 %v285
    %v357 = vunpack.c.l.b16 %v286
    %v358 = vunpack.c.l.b16 %v287
    %v359 = vunpack.c.l.b16 %v288
    %v360 = vunpack.c.l.b16 %v289
    %v361 = vunpack.c.l.b16 %v290
    %v362 = vunpack.c.l.b16 %v291
    %v363 = vunpack.c.l.b16 %v292
    %v364 = vunpack.c.l.b16 %v293
    %v365 = vunpack.c.l.b16 %v294
    %v366 = vpack.c.b16 %v335, %v334
    %v367 = vpack.c.b16 %v337, %v336
    %v368 = vpack.c.b16 %v339, %v338
    %v369 = vpack.c.b16 %v341, %v340
    %v370 = vpack.c.b16 %v343, %v342
    %v371 = vpack.c.b16 %v345, %v344
    %v372 = vpack.c.b16 %v347, %v346
    %v373 = vpack.c.b16 %v349, %v348
    %v374 = vpack.c.b16 %v351, %v350
    %v375 = vpack.c.b16 %v353, %v352
    %v376 = vpack.c.b16 %v355, %v354
    %v377 = vpack.c.b16 %v357, %v356
    %v378 = vpack.c.b16 %v359, %v358
    %v379 = vpack.c.b16 %v361, %v360
    %v380 = vpack.c.b16 %v363, %v362
    %v381 = vpack.c.b16 %v365, %v364
    %398 = vmatprep.subr.bf16.mxu0 0
    %399 = vmatpush1.bf16.msra.mxu0 %v373
    %400 = vmatprep.subr.bf16.mxu0 0
    %401 = vmatpush1.bf16.msra.mxu0 %v372
    %402 = vmatprep.subr.bf16.mxu0 0
    %403 = vmatpush1.bf16.msra.mxu0 %v371
    %404 = vmatprep.subr.bf16.mxu0 0
    %405 = vmatpush1.bf16.msra.mxu0 %v370
    %406 = vmatprep.subr.bf16.mxu0 0
    %407 = vmatpush1.bf16.msra.mxu0 %v369
    %408 = vmatprep.subr.bf16.mxu0 0
    %409 = vmatpush1.bf16.msra.mxu0 %v368
    %410 = vmatprep.subr.bf16.mxu0 0
    %411 = vmatpush1.bf16.msra.mxu0 %v367
    %412 = vmatprep.subr.bf16.mxu0 0
    %413 = vmatpush1.bf16.msra.mxu0 %v366
    %414 = vmatprep.subr.bf16.mxu0 0
    %415 = vmatpush2.bf16.msra.mxu0 %v381
    %416 = vmatprep.subr.bf16.mxu0 0
    %417 = vmatpush2.bf16.msra.mxu0 %v380
    %418 = vmatprep.subr.bf16.mxu0 0
    %419 = vmatpush2.bf16.msra.mxu0 %v379
    %420 = vmatprep.subr.bf16.mxu0 0
    %421 = vmatpush2.bf16.msra.mxu0 %v378
    %422 = vmatprep.subr.bf16.mxu0 0
    %423 = vmatpush2.bf16.msra.mxu0 %v377
    %424 = vmatprep.subr.bf16.mxu0 0
    %425 = vmatpush2.bf16.msra.mxu0 %v376
    %426 = vmatprep.subr.bf16.mxu0 0
    %427 = vmatpush2.bf16.msra.mxu0 %v375
    %428 = vmatprep.subr.bf16.mxu0 0
    %429 = vmatpush2.bf16.msra.mxu0 %v374
    %430 = vmatprep.mubr.bf16.mxu0 %v262
    %431 = vmatmul.mubr.bf16.gmra.mxu0 %v261
    %v432 = vpop.f32.mrf.mxu0
    %v433 = vadd.f32 %v300, %v432
    %v434 = vpop.f32.mrf.mxu0
    %v435 = vpop.f32.mrf.mxu0
    %v436 = vadd.f32 %v300, %v435
    %v437 = vpop.f32.mrf.mxu0
    %438 = vdwg.mxu0
    %v439 = vmax.f32 %v433, 0.0
    %v440 = vmax.f32 %v436, 0.0
    %v441 = vpack.c.bf16 %v440, %v439
    %v442 = vld [vmem:[#allocation9] sm:$0xf]
    %v443 = vld [vmem:[#allocation9 + $0x4] sm:$0xf]
    %v444 = vld [vmem:[#allocation9 + $0x8] sm:$0xf]
    %v445 = vld [vmem:[#allocation9 + $0xc] sm:$0xf]
    %v446 = vld [vmem:[#allocation9 + $0x10] sm:$0xf]
    %v447 = vld [vmem:[#allocation9 + $0x14] sm:$0xf]
    %v448 = vld [vmem:[#allocation9 + $0x18] sm:$0xf]
    %v449 = vld [vmem:[#allocation9 + $0x1c] sm:$0xf]
    %v450 = vld [vmem:[#allocation9 + $0x20] sm:$0xf]
    %v451 = vld [vmem:[#allocation9 + $0x24] sm:$0xf]
    %v452 = vld [vmem:[#allocation9 + $0x28] sm:$0xf]
    %v453 = vld [vmem:[#allocation9 + $0x2c] sm:$0xf]
    %v454 = vld [vmem:[#allocation9 + $0x30] sm:$0xf]
    %v455 = vld [vmem:[#allocation9 + $0x34] sm:$0xf]
    %v456 = vld [vmem:[#allocation9 + $0x38] sm:$0xf]
    %v457 = vld [vmem:[#allocation9 + $0x3c] sm:$0xf]
    %v458 = vld [vmem:[%s6] sm:$0x1]
    %v460 = vlaneseq
    %v461 = vshrl.u32 %v460, 7
    %v462 = vsub.s32 0, %v461
    %v463 = vrot.slane %v458, %v462
    %v481 = vunpack.c.l.b16 %v442
    %v482 = vunpack.c.l.b16 %v443
    %v483 = vunpack.c.l.b16 %v444
    %v484 = vunpack.c.l.b16 %v445
    %v485 = vunpack.c.l.b16 %v446
    %v486 = vunpack.c.l.b16 %v447
    %v487 = vunpack.c.l.b16 %v448
    %v488 = vunpack.c.l.b16 %v449
    %v489 = vunpack.c.l.b16 %v450
    %v490 = vunpack.c.l.b16 %v451
    %v491 = vunpack.c.l.b16 %v452
    %v492 = vunpack.c.l.b16 %v453
    %v493 = vunpack.c.l.b16 %v454
    %v494 = vunpack.c.l.b16 %v455
    %v495 = vunpack.c.l.b16 %v456
    %v496 = vunpack.c.l.b16 %v457
    %v497 = vpack.c.b16 %v482, %v481
    %v498 = vpack.c.b16 %v484, %v483
    %v499 = vpack.c.b16 %v486, %v485
    %v500 = vpack.c.b16 %v488, %v487
    %v501 = vpack.c.b16 %v490, %v489
    %v502 = vpack.c.b16 %v492, %v491
    %v503 = vpack.c.b16 %v494, %v493
    %v504 = vpack.c.b16 %v496, %v495
    %513 = vmatprep.subr.bf16.mxu0 0
    %514 = vmatpush1.bf16.msra.mxu0 %v504
    %515 = vmatprep.subr.bf16.mxu0 0
    %516 = vmatpush1.bf16.msra.mxu0 %v503
    %517 = vmatprep.subr.bf16.mxu0 0
    %518 = vmatpush1.bf16.msra.mxu0 %v502
    %519 = vmatprep.subr.bf16.mxu0 0
    %520 = vmatpush1.bf16.msra.mxu0 %v501
    %521 = vmatprep.subr.bf16.mxu0 0
    %522 = vmatpush1.bf16.msra.mxu0 %v500
    %523 = vmatprep.subr.bf16.mxu0 0
    %524 = vmatpush1.bf16.msra.mxu0 %v499
    %525 = vmatprep.subr.bf16.mxu0 0
    %526 = vmatpush1.bf16.msra.mxu0 %v498
    %527 = vmatprep.subr.bf16.mxu0 0
    %528 = vmatpush1.bf16.msra.mxu0 %v497
    %529 = vmatprep.subr.bf16.mxu0 0
    %530 = vmatpush2.bf16.msra.mxu0 0
    %531 = vmatprep.subr.bf16.mxu0 0
    %532 = vmatpush2.bf16.msra.mxu0 0
    %533 = vmatprep.subr.bf16.mxu0 0
    %534 = vmatpush2.bf16.msra.mxu0 0
    %535 = vmatprep.subr.bf16.mxu0 0
    %536 = vmatpush2.bf16.msra.mxu0 0
    %537 = vmatprep.subr.bf16.mxu0 0
    %538 = vmatpush2.bf16.msra.mxu0 0
    %539 = vmatprep.subr.bf16.mxu0 0
    %540 = vmatpush2.bf16.msra.mxu0 0
    %541 = vmatprep.subr.bf16.mxu0 0
    %542 = vmatpush2.bf16.msra.mxu0 0
    %543 = vmatprep.subr.bf16.mxu0 0
    %544 = vmatpush2.bf16.msra.mxu0 0
    %545 = vmatprep.mubr.bf16.mxu0 0
    %546 = vmatmul.mubr.bf16.gmra.mxu0 %v441
    %v547 = vpop.f32.mrf.mxu0
    %v548 = vadd.f32 %v463, %v547
    %v549 = vpop.f32.mrf.mxu0
    %v550 = vpop.f32.mrf.mxu0
    %v551 = vadd.f32 %v463, %v550
    %v552 = vpop.f32.mrf.mxu0
    %553 = vdwg.mxu0
    %554 = vst [vmem:[#allocation11] sm:$0xff] %v548
    %555 = vst [vmem:[#allocation11 + $0x8] sm:$0xff] %v551
    // Predicated region
    $region46: #{tpu_custom_call.1} parent=1 // pred_check
      _
    $region47: #{tpu_custom_call.1} parent=1 // pred_check_branch
      %557 = sbr.rel (0) target = $region49
    $region48: #{tpu_custom_call.1} parent=1 // pred_region
      %s559 = ssub.s32 256, 256
      %560 = vsyncadd [#allocation5], %s559
      %s561 = sshll.u32 [#allocation11], 4
      %s562 = int_to_ptr.vmem [resolvable:$true] %s561
      %567 = dma.vmem_to_hbm [thread:$0]  %s562, 256, %s7, [#allocation5], 128, 128, 8
    $region49: #{tpu_custom_call.1} parent=1 // pred_fallthru
      _
    // Predicated region
    $region50: #{tpu_custom_call.1} parent=1 // pred_check
      _
    $region51: #{tpu_custom_call.1} parent=1 // pred_check_branch
      %569 = sbr.rel (0) target = $region53
    $region52: #{tpu_custom_call.1} parent=1 // pred_region
      %570 = dma.done [#allocation5], 256
    $region53: #{tpu_custom_call.1} parent=1 // pred_fallthru
      _
    %571 = vsyncpa [#allocation4], 1
    %572 = vsyncpa [#allocation7], 1
    %573 = vsyncpa [#allocation10], 1
    %574 = vsyncpa [#allocation5], 1

</llo_original>
